<compile_context>
chip_gen: v6e
topology: v6e:2x2x1
jax: 0.10.0
libtpu: 0.0.40
codegen_flags: <defaults>
</compile_context>

<pallas_src>
import math

import jax
import jax.numpy as jnp
from jax.experimental import pallas as pl
from jax.experimental.pallas import tpu as pltpu


def _penc_kernel(d_ref, c_ref, out_ref):
    # d_ref:   (tr, k)        distances, k consecutive positions per row
    # c_ref:   (k+1, k*ch)    rows 0..k-1: frequency selector (inv_freq repeated
    #                         x2 inside lane-group j, zero elsewhere);
    #                         row k: phase offsets (0, pi/2, 0, pi/2, ...) tiled
    # out_ref: (tr, k*ch)     lane-dense positional-encoding tile
    k = d_ref.shape[-1]
    d = d_ref[...]                       # (tr, k)
    c = c_ref[...]                       # (k+1, k*ch)
    off = c[k:k + 1, :]                  # (1, k*ch)

    # phase[r, j*ch + cc] = d[r, j] * inv_freq[cc // 2] + offset[cc]
    # Exact f32: each lane receives exactly one nonzero product.
    phase = d[:, 0:1] * c[0:1, :]
    for j in range(1, k):
        phase = phase + d[:, j:j + 1] * c[j:j + 1, :]
    phase = phase + off

    out_ref[...] = jnp.sin(phase).astype(out_ref.dtype)


def positional_encoding_1d(distance, channels):
    """
    distance: (B, X, 1) float array
    channels: org_channels of the module (rounded up to even, like the module)
    returns:  (B, X, ceil(channels/2)*2) float32 positional encoding with
              out[..., 2k]   = sin(d * inv_freq[k])
              out[..., 2k+1] = cos(d * inv_freq[k])
    """
    if distance.ndim != 3 or distance.shape[-1] != 1:
        raise RuntimeError("The input tensor has to be 3d with trailing dim 1!")
    b, x, _ = distance.shape
    ch = int(math.ceil(channels / 2) * 2)
    half = ch // 2

    # Fold k consecutive positions per output row -> row length k*ch is a
    # multiple of 128 lanes (dense, unmasked stores).
    k = math.lcm(ch, 128) // ch
    kch = k * ch

    n = b * x
    rows = (n + k - 1) // k
    n_pad = rows * k

    d_flat = distance.reshape(n).astype(jnp.float32)
    if n_pad != n:
        d_flat = jnp.pad(d_flat, (0, n_pad - n))
    d2 = d_flat.reshape(rows, k)

    # ---- host-side constants (scalar path) --------------------------------
    inv_freq = 1.0 / (10000.0 ** (jnp.arange(0, ch, 2, dtype=jnp.float32) / ch))
    freq_full = jnp.repeat(inv_freq, 2)                                   # (ch,)
    offset = jnp.tile(jnp.array([0.0, math.pi / 2.0], jnp.float32), half)  # (ch,)
    # W[j, j*ch + cc] = freq_full[cc], zero outside lane-group j.
    w = (jnp.eye(k, dtype=jnp.float32)[:, :, None]
         * freq_full[None, None, :]).reshape(k, kch)
    const = jnp.concatenate([w, jnp.tile(offset, k)[None, :]], axis=0)    # (k+1, kch)

    # ---- VMEM-aware row-tile sizing (padded bytes, x2 double buffers) -----
    bytes_dist_row = 4 * max(k, 128)   # (tr, k) block pads its lane dim to 128
    bytes_out_row = 4 * kch            # lane-dense output row (no padding)
    per_row = 2 * (bytes_dist_row + bytes_out_row)
    budget = 8 << 20                   # safe under v5e 16 MiB / v6e,v7x 32 MiB scoped
    tr_cap = max(8, (budget // per_row) // 8 * 8)
    tr = rows if rows <= tr_cap else tr_cap
    grid = (pl.cdiv(rows, tr),)

    cost = pl.CostEstimate(
        flops=2 * (k + 1) * n_pad * ch,
        transcendentals=n_pad * ch,
        bytes_accessed=4 * (n_pad + (k + 1) * kch + n_pad * ch),
    )

    out2d = pl.pallas_call(
        _penc_kernel,
        out_shape=jax.ShapeDtypeStruct((rows, kch), jnp.float32),
        grid_spec=pltpu.PrefetchScalarGridSpec(
            num_scalar_prefetch=0,
            grid=grid,
            in_specs=[
                pl.BlockSpec((tr, k), lambda i: (i, 0)),
                pl.BlockSpec((k + 1, kch), lambda i: (0, 0)),  # constant, DMA'd once
            ],
            out_specs=pl.BlockSpec((tr, kch), lambda i: (i, 0)),
        ),
        compiler_params=pltpu.CompilerParams(
            dimension_semantics=("parallel",),
            vmem_limit_bytes=32 << 20,
        ),
        cost_estimate=cost,
    )(d2, const)

    out = out2d.reshape(n_pad, ch)
    if n_pad != n:
        out = out[:n]
    return out.reshape(b, x, ch)


def _reference(distance, channels):
    # Pure-JAX mirror of the PyTorch forward (stack(sin, cos) then flatten).
    ch = int(math.ceil(channels / 2) * 2)
    inv_freq = 1.0 / (10000.0 ** (jnp.arange(0, ch, 2, dtype=jnp.float32) / ch))
    sin_inp = distance.astype(jnp.float32) * inv_freq          # (B, X, ch//2)
    emb = jnp.stack((jnp.sin(sin_inp), jnp.cos(sin_inp)), axis=-1)
    return emb.reshape(emb.shape[0], emb.shape[1], ch)


if __name__ == "__main__":
    key = jax.random.PRNGKey(0)
    k0, k1 = jax.random.split(key)

    # Aligned case: (B*X) is a multiple of the lane-fold factor.
    B, X, CHANNELS = 2, 16, 32
    distance = jax.random.uniform(
        k0, (B, X, 1), dtype=jnp.float32, minval=0.0, maxval=10.0
    )
    out = jax.block_until_ready(positional_encoding_1d(distance, CHANNELS))
    ref = _reference(distance, CHANNELS)
    assert out.shape == (B, X, CHANNELS)
    assert jnp.allclose(out, ref, atol=2e-5, rtol=2e-5)

    # Ragged case: (B*X) not a multiple of the fold factor (wrapper pads/slices).
    B2, X2 = 3, 5
    distance2 = jax.random.uniform(
        k1, (B2, X2, 1), dtype=jnp.float32, minval=0.0, maxval=10.0
    )
    out2 = jax.block_until_ready(positional_encoding_1d(distance2, CHANNELS))
    ref2 = _reference(distance2, CHANNELS)
    assert out2.shape == (B2, X2, CHANNELS)
    assert jnp.allclose(out2, ref2, atol=2e-5, rtol=2e-5)

    print("KERNEL_OK")
</pallas_src>

<mosaic_0001>
module attributes {stable_mosaic.version = 11 : i64} {
  func.func @_penc_kernel(%arg0: i32, %arg1: memref<8x4xf32, #tpu.memory_space<vmem>>, %arg2: memref<5x128xf32, #tpu.memory_space<vmem>>, %arg3: memref<8x128xf32, #tpu.memory_space<vmem>>) attributes {dimension_semantics = [#tpu.dimension_semantics<parallel>], iteration_bounds = array<i64: 1>, scalar_prefetch = 0 : i64, scratch_operands = 0 : i64, tpu.core_type = #tpu.core_type<tc>, window_params = [{transform_indices = @transform_0, window_bounds = array<i64: 8, 4>}, {pipeline_mode = #tpu.pipeline_mode<synchronous>, transform_indices = @transform_1, window_bounds = array<i64: 5, 128>}, {transform_indices = @transform_2, window_bounds = array<i64: 8, 128>}]} {
    %c0 = arith.constant 0 : index
    %c0_0 = arith.constant 0 : index
    %0 = vector.load %arg1[%c0, %c0_0] : memref<8x4xf32, #tpu.memory_space<vmem>>, vector<8x4xf32>
    %c0_1 = arith.constant 0 : index
    %c0_2 = arith.constant 0 : index
    %1 = vector.load %arg2[%c0_1, %c0_2] : memref<5x128xf32, #tpu.memory_space<vmem>>, vector<5x128xf32>
    %2 = vector.extract_strided_slice %1 {offsets = [4, 0], sizes = [1, 128], strides = [1, 1]} : vector<5x128xf32> to vector<1x128xf32>
    %3 = vector.extract_strided_slice %0 {offsets = [0, 0], sizes = [8, 1], strides = [1, 1]} : vector<8x4xf32> to vector<8x1xf32>
    %4 = vector.extract_strided_slice %1 {offsets = [0, 0], sizes = [1, 128], strides = [1, 1]} : vector<5x128xf32> to vector<1x128xf32>
    %5 = vector.broadcast %3 : vector<8x1xf32> to vector<8x128xf32>
    %6 = vector.broadcast %4 : vector<1x128xf32> to vector<8x128xf32>
    %7 = arith.mulf %5, %6 : vector<8x128xf32>
    %8 = vector.extract_strided_slice %0 {offsets = [0, 1], sizes = [8, 1], strides = [1, 1]} : vector<8x4xf32> to vector<8x1xf32>
    %9 = vector.extract_strided_slice %1 {offsets = [1, 0], sizes = [1, 128], strides = [1, 1]} : vector<5x128xf32> to vector<1x128xf32>
    %10 = vector.broadcast %8 : vector<8x1xf32> to vector<8x128xf32>
    %11 = vector.broadcast %9 : vector<1x128xf32> to vector<8x128xf32>
    %12 = arith.mulf %10, %11 : vector<8x128xf32>
    %13 = arith.addf %7, %12 : vector<8x128xf32>
    %14 = vector.extract_strided_slice %0 {offsets = [0, 2], sizes = [8, 1], strides = [1, 1]} : vector<8x4xf32> to vector<8x1xf32>
    %15 = vector.extract_strided_slice %1 {offsets = [2, 0], sizes = [1, 128], strides = [1, 1]} : vector<5x128xf32> to vector<1x128xf32>
    %16 = vector.broadcast %14 : vector<8x1xf32> to vector<8x128xf32>
    %17 = vector.broadcast %15 : vector<1x128xf32> to vector<8x128xf32>
    %18 = arith.mulf %16, %17 : vector<8x128xf32>
    %19 = arith.addf %13, %18 : vector<8x128xf32>
    %20 = vector.extract_strided_slice %0 {offsets = [0, 3], sizes = [8, 1], strides = [1, 1]} : vector<8x4xf32> to vector<8x1xf32>
    %21 = vector.extract_strided_slice %1 {offsets = [3, 0], sizes = [1, 128], strides = [1, 1]} : vector<5x128xf32> to vector<1x128xf32>
    %22 = vector.broadcast %20 : vector<8x1xf32> to vector<8x128xf32>
    %23 = vector.broadcast %21 : vector<1x128xf32> to vector<8x128xf32>
    %24 = arith.mulf %22, %23 : vector<8x128xf32>
    %25 = arith.addf %19, %24 : vector<8x128xf32>
    %26 = vector.broadcast %2 : vector<1x128xf32> to vector<8x128xf32>
    %27 = arith.addf %25, %26 : vector<8x128xf32>
    %28 = math.sin %27 : vector<8x128xf32>
    %c0_3 = arith.constant 0 : index
    %c0_4 = arith.constant 0 : index
    %29 = vector.load %arg3[%c0_3, %c0_4] : memref<8x128xf32, #tpu.memory_space<vmem>>, vector<8x128xf32>
    tpu.vector_store %arg3[%c0_3, %c0_4], %28 {strides = array<i32>} : memref<8x128xf32, #tpu.memory_space<vmem>>, vector<8x128xf32>,
    return
  }
  func.func @transform_0(%arg0: i32) -> (i32, i32) {
    %c0_i32 = arith.constant 0 : i32
    %c0_i32_0 = arith.constant 0 : i32
    return %arg0, %c0_i32 : i32, i32
  }
  func.func @transform_1(%arg0: i32) -> (i32, i32) {
    %c0_i32 = arith.constant 0 : i32
    %c0_i32_0 = arith.constant 0 : i32
    %c0_i32_1 = arith.constant 0 : i32
    return %c0_i32, %c0_i32_0 : i32, i32
  }
  func.func @transform_2(%arg0: i32) -> (i32, i32) {
    %c0_i32 = arith.constant 0 : i32
    %c0_i32_0 = arith.constant 0 : i32
    return %arg0, %c0_i32 : i32, i32
  }
}

</mosaic_0001>

<llo_original>
// kernel: tpu_custom_call.1
$region0: #{tpu_custom_call.1}
  #allocation0 [shape = 'u32[]', space=smem, size = 0x4, offset = 0x4, fixed_abs, tag = 'smem constant byte address 0x4 - core index']
  #allocation1 [shape = 'u32[144,128]{1,0:T(1,128)}', space=vmem, size = 0x12000, scoped, tag = 'internal scratch']
  %s0 = inlined_call_operand.vmem [shape: f32[8,4], index: 0, kind: input, shape index: {}]
  %s1 = inlined_call_operand.vmem [shape: f32[5,128], index: 1, kind: input, shape index: {}]
  %s2 = inlined_call_operand.hbm [shape: f32[8,128], index: 2, kind: output, shape index: {}]
  %s3 = sld [smem:[#allocation0]]
  $region18: #{tpu_custom_call.1} parent=0
    _
  %s5 = ssub.s32 1, %s3
  %s6 = scalar_select 0, %s5, %s3
  $region1: #{tpu_custom_call.1} parent=0
    #allocation2 [shape = 'u8[4096]{0}', space=vmem, size = 0x1000, scoped, tag = 'output window, operand 0, single buffered']
    #allocation3 [shape = 's32[1]{0}', space=sflag, size = 0x4, scoped, tag = 'scoped memory for tpu_custom_call.1']
    %7 = vsyncpa [#allocation3], 0
    // Predicated region
    $region2: #{tpu_custom_call.1} parent=1 // pred_check
      _
    $region3: #{tpu_custom_call.1} parent=1 // pred_check_branch
      %9 = sbr.rel (0) target = $region5
    $region4: #{tpu_custom_call.1} parent=1 // pred_region
      _
    $region5: #{tpu_custom_call.1} parent=1 // pred_fallthru
      _
    // Predicated region
    $region6: #{tpu_custom_call.1} parent=1 // pred_check
      _
    $region7: #{tpu_custom_call.1} parent=1 // pred_check_branch
      %11 = sbr.rel (0) target = $region9
    $region8: #{tpu_custom_call.1} parent=1 // pred_region
      _
    $region9: #{tpu_custom_call.1} parent=1 // pred_fallthru
      _
    %v12 = vld [vmem:[%s0] sm:$0xff]
    %v13 = vld [vmem:[%s1] sm:$0x1f]
    %15 = vset.pattern.permute.xlu0 0
    %16 = vperm.xlu0 %15, %v12
    %v17 = vpop.permute.xlu0 %16
    %v19 = vlaneseq
    %v20 = vshrl.u32 %v19, 7
    %v21 = vsub.s32 0, %v20
    %v22 = vrot.slane %v13, %v21
    %v23 = vmul.f32 %v17, %v22
    %24 = vset.pattern.permute.xlu0 1
    %25 = vperm.xlu0 %24, %v12
    %v26 = vpop.permute.xlu0 %25
    %v28 = vlaneseq
    %v29 = vshrl.u32 %v28, 7
    %v30 = vsub.s32 1, %v29
    %v31 = vrot.slane %v13, %v30
    %v32 = vmul.f32 %v26, %v31
    %v33 = vadd.f32 %v23, %v32
    %34 = vset.pattern.permute.xlu0 2
    %35 = vperm.xlu0 %34, %v12
    %v36 = vpop.permute.xlu0 %35
    %v38 = vlaneseq
    %v39 = vshrl.u32 %v38, 7
    %v40 = vsub.s32 2, %v39
    %v41 = vrot.slane %v13, %v40
    %v42 = vmul.f32 %v36, %v41
    %v43 = vadd.f32 %v33, %v42
    %44 = vset.pattern.permute.xlu0 3
    %45 = vperm.xlu0 %44, %v12
    %v46 = vpop.permute.xlu0 %45
    %v48 = vlaneseq
    %v49 = vshrl.u32 %v48, 7
    %v50 = vsub.s32 3, %v49
    %v51 = vrot.slane %v13, %v50
    %v52 = vmul.f32 %v46, %v51
    %v53 = vadd.f32 %v43, %v52
    %v54 = vlaneseq
    %v55 = vshrl.u32 %v54, 7
    %v56 = vsub.s32 4, %v55
    %v57 = vrot.slane %v13, %v56
    %v58 = vadd.f32 %v53, %v57
    %v59 = vand.u32 2147483647, %v58
    %vm60 = vcmp.le.f32.partialorder %v59, 0.7853982
    %vm61 = vcmp.lt.s32.totalorder %v58, 0
    %v62 = vand.u32 %v58, 2139095040
    %v63 = vshrl.u32 %v62, 23
    %v64 = vsub.s32 %v63, 127
    %v65 = vand.u32 2147483647, %v58
    %v66 = vand.u32 %v65, 8388607
    %v67 = vor.u32 %v66, 8388608
    %v68 = vsub.s32 0, %v67
    %v69 = vadd.s32 %v64, 1
    %vm70 = vcmp.gt.s32.totalorder %v69, 0
    %v71 = vsel %vm70, %v69, 0
    %v72 = vshrl.u32 %v71, 5
    %v73 = vand.u32 %v71, 31
    %v74 = vsub.s32 32, %v73
    %v75 = vshrl.u32 683565275, %v74
    %v76 = vshll.u32 683565275, %v73
    %v77 = vshrl.u32 2475754826, %v74
    %v78 = vor.u32 %v76, %v77
    %v79 = vshll.u32 2475754826, %v73
    %v80 = vshrl.u32 2131351028, %v74
    %v81 = vor.u32 %v79, %v80
    %v82 = vshll.u32 2131351028, %v73
    %v83 = vshrl.u32 2102212464, %v74
    %v84 = vor.u32 %v82, %v83
    %v85 = vshll.u32 2102212464, %v73
    %v86 = vshrl.u32 920167782, %v74
    %v87 = vor.u32 %v85, %v86
    %v88 = vshll.u32 920167782, %v73
    %v89 = vshrl.u32 1326507024, %v74
    %v90 = vor.u32 %v88, %v89
    %vm91 = vcmp.lt.s32.totalorder %v72, 1
    %vm92 = vcmp.lt.s32.totalorder %v72, 2
    %vm93 = vcmp.lt.s32.totalorder %v72, 3
    %vm94 = vcmp.lt.s32.totalorder %v72, 4
    %v95 = vsel %vm91, %v75, %v78
    %v96 = vsel %vm94, %v84, 2102212464
    %v97 = vsel %vm93, %v81, %v96
    %v98 = vsel %vm92, %v95, %v97
    %v99 = vsel %vm91, %v78, %v81
    %v100 = vsel %vm94, %v87, 920167782
    %v101 = vsel %vm93, %v84, %v100
    %v102 = vsel %vm92, %v99, %v101
    %v103 = vsel %vm91, %v81, %v84
    %v104 = vsel %vm94, %v90, 1326507024
    %v105 = vsel %vm93, %v87, %v104
    %v106 = vsel %vm92, %v103, %v105
    %v107 = vshll.u32 %v67, 8
    %v108 = vmul.u32.u64.compose %v107, %v106
    %v109 = vextract.low.u32 %v108
    %v110 = vextract.high.u32 %v108
    %v111 = vmul.u32.u64.compose %v107, %v102
    %v112 = vextract.low.u32 %v111
    %v113 = vextract.high.u32 %v111
    %v114 = vmul.u32 %v107, %v98
    %v115 = vadd.s32 %v110, %v112
    %vm116 = vc.u32 %v110, %v112
    %v117 = vadd.s32 %v113, 1
    %v118 = vsel %vm116, %v117, %v113
    %v119 = vadd.s32 %v114, %v118
    %v120 = vadd.s32 %v119, 536870912
    %v121 = vshrl.u32 %v120, 30
    %v122 = vshll.u32 %v121, 30
    %v123 = vsub.s32 %v119, %v122
    %vm124 = vcmp.lt.s32.totalorder %v123, 0
    %v125 = vsub.s32 0, %v123
    %v126 = vsel %vm124, %v125, %v123
    %v127 = vclz %v126
    %v128 = vsub.s32 %v127, 2
    %vm129 = vcmp.gt.s32.totalorder 0, %v128
    %v130 = vsel %vm129, 0, %v128
    %v131 = vsub.s32 32, %v130
    %v132 = vshll.u32 %v123, %v130
    %v133 = vshrl.u32 %v115, %v131
    %v134 = vor.u32 %v132, %v133
    %v135 = vsub.s32 4294967266, %v130
    %v136 = vadd.s32 %v135, 127
    %v137 = vshll.u32 %v136, 23
    %v138 = vor.u32 4788187, %v137
    %v139 = vand.u32 2147483647, %v138
    %v141 = vcvt.s32.f32 %v134
    %v142 = vmul.f32 %v141, %v139
    %v143 = vxor.u32 %v142, 2147483648
    %v144 = vsel %vm61, %v143, %v142
    %v145 = vsub.s32 4, %v121
    %v146 = vsel %vm61, %v145, %v121
    %v147 = vsel %vm60, %v58, %v144
    %v148 = vsel %vm60, 0, %v146
    %v149 = vcosq.f32.pop %v147
    %v150 = vsinq.f32.pop %v147
    %vm151 = vweird.f32 %v58
    %v152 = vadd.s32 %v148, 3
    %v153 = vand.u32 %v152, 3
    %vm154 = vcmp.lt.s32.totalorder %v153, 2
    %vm155 = vcmp.eq.s32.totalorder %v153, 0
    %v156 = vxor.u32 %v150, 2147483648
    %v157 = vsel %vm155, %v149, %v156
    %vm158 = vcmp.eq.s32.totalorder %v153, 2
    %v159 = vxor.u32 %v149, 2147483648
    %v160 = vsel %vm158, %v159, %v150
    %v161 = vsel %vm154, %v157, %v160
    %v162 = vsel %vm151, nan, %v161
    %163 = vst [vmem:[#allocation2] sm:$0xff] %v162
    // Predicated region
    $region10: #{tpu_custom_call.1} parent=1 // pred_check
      _
    $region11: #{tpu_custom_call.1} parent=1 // pred_check_branch
      %165 = sbr.rel (0) target = $region13
    $region12: #{tpu_custom_call.1} parent=1 // pred_region
      %s167 = ssub.s32 128, 128
      %168 = vsyncadd [#allocation3], %s167
      %s170 = sshll.u32 [#allocation2], 4
      %s171 = int_to_ptr.vmem [resolvable:$true] %s170
      %173 = dma.vmem_to_hbm [thread:$0]  %s171, 128, %s2, [#allocation3]
    $region13: #{tpu_custom_call.1} parent=1 // pred_fallthru
      _
    // Predicated region
    $region14: #{tpu_custom_call.1} parent=1 // pred_check
      _
    $region15: #{tpu_custom_call.1} parent=1 // pred_check_branch
      %175 = sbr.rel (0) target = $region17
    $region16: #{tpu_custom_call.1} parent=1 // pred_region
      %176 = dma.done [#allocation3], 128
    $region17: #{tpu_custom_call.1} parent=1 // pred_fallthru
      _
    %177 = vsyncpa [#allocation3], 1

</llo_original>
